<compile_context>
chip_gen: v5e
topology: v5e:2x2
jax: 0.10.0
libtpu: 0.0.40
codegen_flags: <defaults>
</compile_context>

<pallas_src>
import functools

import jax
import jax.numpy as jnp
from jax.experimental import pallas as pl
from jax.experimental.pallas import tpu as pltpu


# ----------------------------------------------------------------------------
# Pallas kernels
# ----------------------------------------------------------------------------
def _make_backbone_kernel(inv_s, matmul_dtype):
    """Backbone forward_DVC, tiled over (batch, spatial)."""

    def kernel(x_ref, wc_ref, bc_ref, wf_ref, bf_ref, zz_ref, fea_ref, acc_ref):
        s = pl.program_id(1)

        @pl.when(s == 0)
        def _init():
            acc_ref[...] = jnp.zeros_like(acc_ref)

        # One large 2-D matmul per grid step: (tS, C) @ (C, F) on the MXU.
        x = x_ref[0].astype(matmul_dtype)                        # (tS, C)
        w = wc_ref[...].astype(matmul_dtype)                     # (C, F)
        h = jnp.dot(x, w, preferred_element_type=jnp.float32)    # (tS, F), f32
        h = jnp.maximum(h + bc_ref[...], 0.0)                    # bias + ReLU
        # Partial spatial sum for the global-average-pool (f32 accumulation).
        acc_ref[...] += jnp.sum(h, axis=0, keepdims=True)        # (1, F)

        @pl.when(s == pl.num_programs(1) - 1)
        def _finalize():
            fea_row = acc_ref[...] * inv_s                       # (1, F)  GAP
            fea_ref[...] = fea_row.reshape(fea_ref.shape).astype(fea_ref.dtype)
            zz_row = (jnp.dot(fea_row, wf_ref[...],
                              preferred_element_type=jnp.float32)
                      + bf_ref[...])                             # (1, K)
            zz_ref[...] = zz_row.reshape(zz_ref.shape).astype(zz_ref.dtype)

    return kernel


def qnet_kernel(zcat_ref, w1_ref, b1_ref, w2_ref, b2_ref, out_ref):
    """QNet: Linear(2*n_classes, n_units) -> ReLU -> Linear(n_units, n_classes)."""
    h = (jnp.dot(zcat_ref[...], w1_ref[...],
                 preferred_element_type=jnp.float32) + b1_ref[...])
    h = jnp.maximum(h, 0.0)
    out_ref[...] = (jnp.dot(h, w2_ref[...],
                            preferred_element_type=jnp.float32)
                    + b2_ref[...]).astype(out_ref.dtype)


# ----------------------------------------------------------------------------
# Wrappers around pallas_call
# ----------------------------------------------------------------------------
def _choose_block_s(S, requested=None, cap=2048):
    """Largest spatial tile that divides S, is sublane-aligned (x8) and <= cap."""
    if requested is not None:
        if S % requested != 0 or (requested % 8 != 0 and requested != S):
            raise ValueError(f"block_s={requested} incompatible with S={S}")
        return requested
    best = None
    t = 8
    while t <= min(S, cap):
        if S % t == 0:
            best = t
        t += 8
    return best if best is not None else S


def backbone_forward_dvc(xx_nchw, params, block_s=None, matmul_dtype=jnp.float32):
    """Synthetic backbone.forward_DVC: 1x1 conv + ReLU + GAP -> fea; linear -> zz."""
    N, C, H, W = xx_nchw.shape
    S = H * W
    F = params['wc'].shape[1]
    K = params['wf'].shape[1]

    # NCHW -> channels-last (N, S, C): channels on lanes so the hot loop is a
    # single (tS, C) @ (C, F) matmul per grid step.
    x_cl = jnp.transpose(xx_nchw, (0, 2, 3, 1)).reshape(N, S, C)

    ts = _choose_block_s(S, block_s)
    grid = (N, S // ts)

    # VMEM budget: double-buffered activation tile + f32 intermediate + weights
    # + headroom; capped v7x-safe (<= 32 MiB scoped).
    x_tile_bytes = ts * C * x_cl.dtype.itemsize
    h_tile_bytes = ts * F * 4
    weight_bytes = (C * F + F + F * K + K) * 4
    est = 2 * x_tile_bytes + 2 * h_tile_bytes + 2 * weight_bytes + (2 << 20)
    vmem_limit = int(min(max(est, 4 << 20), 32 << 20))

    cost = pl.CostEstimate(
        flops=2 * N * S * C * F + 2 * N * F * K,
        transcendentals=0,
        bytes_accessed=(N * S * C + C * F + F * K) * 4 + N * (F + K) * 4,
    )

    kernel = _make_backbone_kernel(1.0 / float(S), matmul_dtype)

    zz, fea = pl.pallas_call(
        kernel,
        out_shape=(jax.ShapeDtypeStruct((N, 1, K), jnp.float32),
                   jax.ShapeDtypeStruct((N, 1, F), jnp.float32)),
        grid=grid,
        in_specs=[
            pl.BlockSpec((1, ts, C), lambda n, s: (n, s, 0)),   # activations
            pl.BlockSpec((C, F), lambda n, s: (0, 0)),          # wc
            pl.BlockSpec((1, F), lambda n, s: (0, 0)),          # bc
            pl.BlockSpec((F, K), lambda n, s: (0, 0)),          # wf
            pl.BlockSpec((1, K), lambda n, s: (0, 0)),          # bf
        ],
        out_specs=(
            pl.BlockSpec((1, 1, K), lambda n, s: (n, 0, 0)),    # zz
            pl.BlockSpec((1, 1, F), lambda n, s: (n, 0, 0)),    # fea
        ),
        scratch_shapes=[pltpu.VMEM((1, F), jnp.float32)],
        compiler_params=pltpu.CompilerParams(
            dimension_semantics=("parallel", "arbitrary"),
            vmem_limit_bytes=vmem_limit),
        cost_estimate=cost,
    )(x_cl, params['wc'], params['bc'], params['wf'], params['bf'])

    return zz.reshape(N, K), fea.reshape(N, F)


def qnet_forward(zcat, params):
    B = zcat.shape[0]
    K = params['w2'].shape[1]
    vmem = pl.BlockSpec(memory_space=pltpu.MemorySpace.VMEM)
    return pl.pallas_call(
        qnet_kernel,
        out_shape=jax.ShapeDtypeStruct((B, K), jnp.float32),
        in_specs=[vmem] * 5,
        out_specs=vmem,
    )(zcat, params['w1'], params['b1'], params['w2'], params['b2'])


def dvcnet_forward(x, xt, params, has_mi_qnet=True, block_s=None,
                   matmul_dtype=jnp.float32):
    """Mirrors DVCNet.forward(x, xt)."""
    size = x.shape[0]
    xx = jnp.concatenate((x, xt), axis=0)                # cat along batch
    zz, fea = backbone_forward_dvc(xx, params, block_s=block_s,
                                   matmul_dtype=matmul_dtype)
    z, zt = zz[:size], zz[size:]
    if not has_mi_qnet:
        return (z, zt, None)
    # Row-wise L1 of features (torch.sum(torch.abs(fea_*), 1).reshape(-1, 1)):
    # computed in the wrapper (cheap) instead of a lane-width-1 kernel output.
    fea_z, fea_zt = fea[:size], fea[size:]
    abs_z = jnp.sum(jnp.abs(fea_z), axis=1, keepdims=True)
    abs_zt = jnp.sum(jnp.abs(fea_zt), axis=1, keepdims=True)
    zcat = jnp.concatenate((z, zt), axis=1)              # (B, 2*n_classes)
    zzt = qnet_forward(zcat, params)
    return (z, zt, zzt, [abs_z, abs_zt])


# ----------------------------------------------------------------------------
# Deterministic parameter init (normal std=0.01, zero biases, like init_weights)
# ----------------------------------------------------------------------------
def init_params(key, C, F, n_classes, n_units, std=0.01):
    k = jax.random.split(key, 4)
    return {
        # backbone: 1x1 conv (C->F) and linear head (F->n_classes)
        'wc': std * jax.random.normal(k[0], (C, F), jnp.float32),
        'bc': jnp.zeros((1, F), jnp.float32),
        'wf': std * jax.random.normal(k[1], (F, n_classes), jnp.float32),
        'bf': jnp.zeros((1, n_classes), jnp.float32),
        # QNet: Linear(2*n_classes, n_units), Linear(n_units, n_classes)
        'w1': std * jax.random.normal(k[2], (2 * n_classes, n_units), jnp.float32),
        'b1': jnp.zeros((1, n_units), jnp.float32),
        'w2': std * jax.random.normal(k[3], (n_units, n_classes), jnp.float32),
        'b2': jnp.zeros((1, n_classes), jnp.float32),
    }


# ----------------------------------------------------------------------------
# Pure-JAX reference for correctness check
# ----------------------------------------------------------------------------
def dvcnet_forward_ref(x, xt, params):
    size = x.shape[0]
    xx = jnp.concatenate((x, xt), axis=0)
    N, C, H, W = xx.shape
    xf = jnp.transpose(xx, (0, 2, 3, 1)).reshape(N, H * W, C)
    h = jnp.maximum(jnp.einsum('nsc,cf->nsf', xf, params['wc']) + params['bc'], 0.0)
    fea = jnp.mean(h, axis=1)
    zz = fea @ params['wf'] + params['bf']
    absfea = jnp.sum(jnp.abs(fea), axis=1, keepdims=True)
    z, zt = zz[:size], zz[size:]
    zcat = jnp.concatenate((z, zt), axis=1)
    hq = jnp.maximum(zcat @ params['w1'] + params['b1'], 0.0)
    zzt = hq @ params['w2'] + params['b2']
    return (z, zt, zzt, [absfea[:size], absfea[size:]])


# ----------------------------------------------------------------------------
if __name__ == "__main__":
    B, C, H, W = 2, 4, 16, 16
    n_classes, n_units, feat = 8, 32, 32

    key = jax.random.PRNGKey(0)
    kx, kxt, kp = jax.random.split(key, 3)
    x = jax.random.normal(kx, (B, C, H, W), jnp.float32)   # NCHW, like PyTorch
    xt = jax.random.normal(kxt, (B, C, H, W), jnp.float32)
    params = init_params(kp, C, feat, n_classes, n_units)

    # block_s=128 forces a multi-step spatial grid (S=256 -> 2 steps) so the
    # accumulate / pl.when finalize path is exercised even at toy sizes.
    fwd = jax.jit(functools.partial(dvcnet_forward, block_s=128))
    z, zt, zzt, feas = fwd(x, xt, params)
    jax.block_until_ready((z, zt, zzt, feas[0], feas[1]))

    # correctness check against pure-JAX reference
    zr, ztr, zztr, feasr = dvcnet_forward_ref(x, xt, params)
    assert jnp.allclose(z, zr, atol=1e-5)
    assert jnp.allclose(zt, ztr, atol=1e-5)
    assert jnp.allclose(zzt, zztr, atol=1e-5)
    assert jnp.allclose(feas[0], feasr[0], atol=1e-5)
    assert jnp.allclose(feas[1], feasr[1], atol=1e-5)

    print("KERNEL_OK")
</pallas_src>

<mosaic_0001>
module attributes {stable_mosaic.version = 11 : i64} {
  func.func @kernel(%arg0: i32, %arg1: i32, %arg2: memref<1x128x4xf32, #tpu.memory_space<vmem>>, %arg3: memref<4x32xf32, #tpu.memory_space<vmem>>, %arg4: memref<1x32xf32, #tpu.memory_space<vmem>>, %arg5: memref<32x8xf32, #tpu.memory_space<vmem>>, %arg6: memref<1x8xf32, #tpu.memory_space<vmem>>, %arg7: memref<1x1x8xf32, #tpu.memory_space<vmem>>, %arg8: memref<1x1x32xf32, #tpu.memory_space<vmem>>, %arg9: memref<1x32xf32, #tpu.memory_space<vmem>>) attributes {dimension_semantics = [#tpu.dimension_semantics<parallel>, #tpu.dimension_semantics<arbitrary>], iteration_bounds = array<i64: 4, 2>, scalar_prefetch = 0 : i64, scratch_operands = 1 : i64, tpu.core_type = #tpu.core_type<tc>, window_params = [{transform_indices = @transform_0, window_bounds = array<i64: 1, 128, 4>}, {pipeline_mode = #tpu.pipeline_mode<synchronous>, transform_indices = @transform_1, window_bounds = array<i64: 4, 32>}, {pipeline_mode = #tpu.pipeline_mode<synchronous>, transform_indices = @transform_2, window_bounds = array<i64: 1, 32>}, {pipeline_mode = #tpu.pipeline_mode<synchronous>, transform_indices = @transform_3, window_bounds = array<i64: 32, 8>}, {pipeline_mode = #tpu.pipeline_mode<synchronous>, transform_indices = @transform_4, window_bounds = array<i64: 1, 8>}, {transform_indices = @transform_5, window_bounds = array<i64: 1, 1, 8>}, {transform_indices = @transform_6, window_bounds = array<i64: 1, 1, 32>}]} {
    %c0_i32 = arith.constant 0 : i32
    %0 = arith.cmpi eq, %arg1, %c0_i32 : i32
    %1 = arith.extui %0 : i1 to i32
    %c0_i32_0 = arith.constant 0 : i32
    %2 = arith.cmpi ne, %1, %c0_i32_0 : i32
    scf.if %2 {
      %cst_14 = arith.constant 0.000000e+00 : f32
      %20 = vector.broadcast %cst_14 : f32 to vector<1x32xf32>
      %c0_15 = arith.constant 0 : index
      %c0_16 = arith.constant 0 : index
      %21 = vector.load %arg9[%c0_15, %c0_16] : memref<1x32xf32, #tpu.memory_space<vmem>>, vector<1x32xf32>
      tpu.vector_store %arg9[%c0_15, %c0_16], %20 {strides = array<i32>} : memref<1x32xf32, #tpu.memory_space<vmem>>, vector<1x32xf32>,
    } else {
    }
    %c0 = arith.constant 0 : index
    %c0_1 = arith.constant 0 : index
    %c0_2 = arith.constant 0 : index
    %3 = vector.load %arg2[%c0, %c0_1, %c0_2] : memref<1x128x4xf32, #tpu.memory_space<vmem>>, vector<1x128x4xf32>
    %4 = vector.shape_cast %3 : vector<1x128x4xf32> to vector<128x4xf32>
    %c0_3 = arith.constant 0 : index
    %c0_4 = arith.constant 0 : index
    %5 = vector.load %arg3[%c0_3, %c0_4] : memref<4x32xf32, #tpu.memory_space<vmem>>, vector<4x32xf32>
    %cst = arith.constant dense<0.000000e+00> : vector<128x32xf32>
    %6 = tpu.matmul %4, %5, %cst {dimension_numbers = #tpu.dot_dimension_numbers<[1], [0], [0], [1], [0, 0, 1, 1], [], []>} : vector<128x4xf32>, vector<4x32xf32>, vector<128x32xf32> -> vector<128x32xf32>
    %c0_5 = arith.constant 0 : index
    %c0_6 = arith.constant 0 : index
    %7 = vector.load %arg4[%c0_5, %c0_6] : memref<1x32xf32, #tpu.memory_space<vmem>>, vector<1x32xf32>
    %8 = vector.broadcast %7 : vector<1x32xf32> to vector<128x32xf32>
    %9 = arith.addf %6, %8 : vector<128x32xf32>
    %cst_7 = arith.constant 0.000000e+00 : f32
    %10 = vector.broadcast %cst_7 : f32 to vector<128x32xf32>
    %11 = arith.maximumf %9, %10 : vector<128x32xf32>
    %c0_8 = arith.constant 0 : index
    %c0_9 = arith.constant 0 : index
    %12 = vector.load %arg9[%c0_8, %c0_9] : memref<1x32xf32, #tpu.memory_space<vmem>>, vector<1x32xf32>
    %cst_10 = arith.constant dense<0.000000e+00> : vector<32xf32>
    %13 = vector.multi_reduction <add>, %11, %cst_10 [0] : vector<128x32xf32> to vector<32xf32>
    %14 = vector.shape_cast %13 : vector<32xf32> to vector<1x32xf32>
    %15 = arith.addf %12, %14 : vector<1x32xf32>
    %c0_11 = arith.constant 0 : index
    %c0_12 = arith.constant 0 : index
    %16 = vector.load %arg9[%c0_11, %c0_12] : memref<1x32xf32, #tpu.memory_space<vmem>>, vector<1x32xf32>
    tpu.vector_store %arg9[%c0_11, %c0_12], %15 {strides = array<i32>} : memref<1x32xf32, #tpu.memory_space<vmem>>, vector<1x32xf32>,
    %c1_i32 = arith.constant 1 : i32
    %17 = arith.cmpi eq, %arg1, %c1_i32 : i32
    %18 = arith.extui %17 : i1 to i32
    %c0_i32_13 = arith.constant 0 : i32
    %19 = arith.cmpi ne, %18, %c0_i32_13 : i32
    scf.if %19 {
      %c0_14 = arith.constant 0 : index
      %c0_15 = arith.constant 0 : index
      %20 = vector.load %arg9[%c0_14, %c0_15] : memref<1x32xf32, #tpu.memory_space<vmem>>, vector<1x32xf32>
      %cst_16 = arith.constant 3.906250e-03 : f32
      %21 = vector.broadcast %cst_16 : f32 to vector<1x32xf32>
      %22 = arith.mulf %20, %21 : vector<1x32xf32>
      %23 = vector.shape_cast %22 : vector<1x32xf32> to vector<1x1x32xf32>
      %c0_17 = arith.constant 0 : index
      %c0_18 = arith.constant 0 : index
      %c0_19 = arith.constant 0 : index
      %24 = vector.load %arg8[%c0_17, %c0_18, %c0_19] : memref<1x1x32xf32, #tpu.memory_space<vmem>>, vector<1x1x32xf32>
      tpu.vector_store %arg8[%c0_17, %c0_18, %c0_19], %23 {strides = array<i32>} : memref<1x1x32xf32, #tpu.memory_space<vmem>>, vector<1x1x32xf32>,
      %c0_20 = arith.constant 0 : index
      %c0_21 = arith.constant 0 : index
      %25 = vector.load %arg5[%c0_20, %c0_21] : memref<32x8xf32, #tpu.memory_space<vmem>>, vector<32x8xf32>
      %cst_22 = arith.constant dense<0.000000e+00> : vector<1x8xf32>
      %26 = tpu.matmul %22, %25, %cst_22 {dimension_numbers = #tpu.dot_dimension_numbers<[1], [0], [0], [1], [0, 0, 1, 1], [], []>} : vector<1x32xf32>, vector<32x8xf32>, vector<1x8xf32> -> vector<1x8xf32>
      %c0_23 = arith.constant 0 : index
      %c0_24 = arith.constant 0 : index
      %27 = vector.load %arg6[%c0_23, %c0_24] : memref<1x8xf32, #tpu.memory_space<vmem>>, vector<1x8xf32>
      %28 = arith.addf %26, %27 : vector<1x8xf32>
      %29 = vector.shape_cast %28 : vector<1x8xf32> to vector<1x1x8xf32>
      %c0_25 = arith.constant 0 : index
      %c0_26 = arith.constant 0 : index
      %c0_27 = arith.constant 0 : index
      %30 = vector.load %arg7[%c0_25, %c0_26, %c0_27] : memref<1x1x8xf32, #tpu.memory_space<vmem>>, vector<1x1x8xf32>
      tpu.vector_store %arg7[%c0_25, %c0_26, %c0_27], %29 {strides = array<i32>} : memref<1x1x8xf32, #tpu.memory_space<vmem>>, vector<1x1x8xf32>,
    } else {
    }
    return
  }
  func.func @transform_0(%arg0: i32, %arg1: i32) -> (i32, i32, i32) {
    %c0_i32 = arith.constant 0 : i32
    %c0_i32_0 = arith.constant 0 : i32
    return %arg0, %arg1, %c0_i32 : i32, i32, i32
  }
  func.func @transform_1(%arg0: i32, %arg1: i32) -> (i32, i32) {
    %c0_i32 = arith.constant 0 : i32
    %c0_i32_0 = arith.constant 0 : i32
    %c0_i32_1 = arith.constant 0 : i32
    return %c0_i32, %c0_i32_0 : i32, i32
  }
  func.func @transform_2(%arg0: i32, %arg1: i32) -> (i32, i32) {
    %c0_i32 = arith.constant 0 : i32
    %c0_i32_0 = arith.constant 0 : i32
    %c0_i32_1 = arith.constant 0 : i32
    return %c0_i32, %c0_i32_0 : i32, i32
  }
  func.func @transform_3(%arg0: i32, %arg1: i32) -> (i32, i32) {
    %c0_i32 = arith.constant 0 : i32
    %c0_i32_0 = arith.constant 0 : i32
    %c0_i32_1 = arith.constant 0 : i32
    return %c0_i32, %c0_i32_0 : i32, i32
  }
  func.func @transform_4(%arg0: i32, %arg1: i32) -> (i32, i32) {
    %c0_i32 = arith.constant 0 : i32
    %c0_i32_0 = arith.constant 0 : i32
    %c0_i32_1 = arith.constant 0 : i32
    return %c0_i32, %c0_i32_0 : i32, i32
  }
  func.func @transform_5(%arg0: i32, %arg1: i32) -> (i32, i32, i32) {
    %c0_i32 = arith.constant 0 : i32
    %c0_i32_0 = arith.constant 0 : i32
    %c0_i32_1 = arith.constant 0 : i32
    return %arg0, %c0_i32, %c0_i32_0 : i32, i32, i32
  }
  func.func @transform_6(%arg0: i32, %arg1: i32) -> (i32, i32, i32) {
    %c0_i32 = arith.constant 0 : i32
    %c0_i32_0 = arith.constant 0 : i32
    %c0_i32_1 = arith.constant 0 : i32
    return %arg0, %c0_i32, %c0_i32_0 : i32, i32, i32
  }
}

module attributes {stable_mosaic.version = 11 : i64} {
  func.func @qnet_kernel(%arg0: memref<2x16xf32, #tpu.memory_space<vmem>>, %arg1: memref<16x32xf32, #tpu.memory_space<vmem>>, %arg2: memref<1x32xf32, #tpu.memory_space<vmem>>, %arg3: memref<32x8xf32, #tpu.memory_space<vmem>>, %arg4: memref<1x8xf32, #tpu.memory_space<vmem>>, %arg5: memref<2x8xf32, #tpu.memory_space<vmem>>) attributes {dimension_semantics = [], scalar_prefetch = 0 : i64, scratch_operands = 0 : i64, tpu.core_type = #tpu.core_type<tc>} {
    %c0 = arith.constant 0 : index
    %c0_0 = arith.constant 0 : index
    %0 = vector.load %arg0[%c0, %c0_0] : memref<2x16xf32, #tpu.memory_space<vmem>>, vector<2x16xf32>
    %c0_1 = arith.constant 0 : index
    %c0_2 = arith.constant 0 : index
    %1 = vector.load %arg1[%c0_1, %c0_2] : memref<16x32xf32, #tpu.memory_space<vmem>>, vector<16x32xf32>
    %cst = arith.constant dense<0.000000e+00> : vector<2x32xf32>
    %2 = tpu.matmul %0, %1, %cst {dimension_numbers = #tpu.dot_dimension_numbers<[1], [0], [0], [1], [0, 0, 1, 1], [], []>} : vector<2x16xf32>, vector<16x32xf32>, vector<2x32xf32> -> vector<2x32xf32>
    %c0_3 = arith.constant 0 : index
    %c0_4 = arith.constant 0 : index
    %3 = vector.load %arg2[%c0_3, %c0_4] : memref<1x32xf32, #tpu.memory_space<vmem>>, vector<1x32xf32>
    %4 = vector.broadcast %3 : vector<1x32xf32> to vector<2x32xf32>
    %5 = arith.addf %2, %4 : vector<2x32xf32>
    %cst_5 = arith.constant 0.000000e+00 : f32
    %6 = vector.broadcast %cst_5 : f32 to vector<2x32xf32>
    %7 = arith.maximumf %5, %6 : vector<2x32xf32>
    %c0_6 = arith.constant 0 : index
    %c0_7 = arith.constant 0 : index
    %8 = vector.load %arg3[%c0_6, %c0_7] : memref<32x8xf32, #tpu.memory_space<vmem>>, vector<32x8xf32>
    %cst_8 = arith.constant dense<0.000000e+00> : vector<2x8xf32>
    %9 = tpu.matmul %7, %8, %cst_8 {dimension_numbers = #tpu.dot_dimension_numbers<[1], [0], [0], [1], [0, 0, 1, 1], [], []>} : vector<2x32xf32>, vector<32x8xf32>, vector<2x8xf32> -> vector<2x8xf32>
    %c0_9 = arith.constant 0 : index
    %c0_10 = arith.constant 0 : index
    %10 = vector.load %arg4[%c0_9, %c0_10] : memref<1x8xf32, #tpu.memory_space<vmem>>, vector<1x8xf32>
    %11 = vector.broadcast %10 : vector<1x8xf32> to vector<2x8xf32>
    %12 = arith.addf %9, %11 : vector<2x8xf32>
    %c0_11 = arith.constant 0 : index
    %c0_12 = arith.constant 0 : index
    %13 = vector.load %arg5[%c0_11, %c0_12] : memref<2x8xf32, #tpu.memory_space<vmem>>, vector<2x8xf32>
    tpu.vector_store %arg5[%c0_11, %c0_12], %12 {strides = array<i32>} : memref<2x8xf32, #tpu.memory_space<vmem>>, vector<2x8xf32>,
    return
  }
}

</mosaic_0001>

<llo_original>
// kernel: dvcnet_forward.3
$region0: #{dvcnet_forward.3}
  #allocation0 [shape = 'u32[]', space=smem, size = 0x4, offset = 0x4, fixed_abs, tag = 'smem constant byte address 0x4 - core index']
  #allocation1 [shape = 'u32[72,128]{1,0:T(1,128)}', space=vmem, size = 0x9000, scoped, tag = 'internal scratch']
  %s0 = inlined_call_operand.vmem [shape: f32[2,16], index: 0, kind: input, shape index: {}]
  %s1 = inlined_call_operand.vmem [shape: f32[16,32], index: 1, kind: input, shape index: {}]
  %s2 = inlined_call_operand.vmem [shape: f32[1,32], index: 2, kind: input, shape index: {}]
  %s3 = inlined_call_operand.vmem [shape: f32[32,8], index: 3, kind: input, shape index: {}]
  %s4 = inlined_call_operand.vmem [shape: f32[1,8], index: 4, kind: input, shape index: {}]
  %s5 = inlined_call_operand.hbm [shape: f32[2,8], index: 5, kind: output, shape index: {}]
  %s6 = sld [smem:[#allocation0]]
  $region30: #{dvcnet_forward.3} parent=0
    _
  %s8 = ssub.s32 1, %s6
  %s9 = scalar_select 0, %s8, %s6
  $region1: #{dvcnet_forward.3} parent=0
    #allocation2 [shape = 'u8[1024]{0}', space=vmem, size = 0x400, scoped, tag = 'output window, operand 0, single buffered']
    #allocation3 [shape = 's32[1]{0}', space=sflag, size = 0x4, scoped, tag = 'scoped memory for dvcnet_forward.3']
    %10 = vsyncpa [#allocation3], 0
    // Predicated region
    $region2: #{dvcnet_forward.3} parent=1 // pred_check
      _
    $region3: #{dvcnet_forward.3} parent=1 // pred_check_branch
      %12 = sbr.rel (0) target = $region5
    $region4: #{dvcnet_forward.3} parent=1 // pred_region
      _
    $region5: #{dvcnet_forward.3} parent=1 // pred_fallthru
      _
    // Predicated region
    $region6: #{dvcnet_forward.3} parent=1 // pred_check
      _
    $region7: #{dvcnet_forward.3} parent=1 // pred_check_branch
      %14 = sbr.rel (0) target = $region9
    $region8: #{dvcnet_forward.3} parent=1 // pred_region
      _
    $region9: #{dvcnet_forward.3} parent=1 // pred_fallthru
      _
    // Predicated region
    $region10: #{dvcnet_forward.3} parent=1 // pred_check
      _
    $region11: #{dvcnet_forward.3} parent=1 // pred_check_branch
      %16 = sbr.rel (0) target = $region13
    $region12: #{dvcnet_forward.3} parent=1 // pred_region
      _
    $region13: #{dvcnet_forward.3} parent=1 // pred_fallthru
      _
    // Predicated region
    $region14: #{dvcnet_forward.3} parent=1 // pred_check
      _
    $region15: #{dvcnet_forward.3} parent=1 // pred_check_branch
      %18 = sbr.rel (0) target = $region17
    $region16: #{dvcnet_forward.3} parent=1 // pred_region
      _
    $region17: #{dvcnet_forward.3} parent=1 // pred_fallthru
      _
    // Predicated region
    $region18: #{dvcnet_forward.3} parent=1 // pred_check
      _
    $region19: #{dvcnet_forward.3} parent=1 // pred_check_branch
      %20 = sbr.rel (0) target = $region21
    $region20: #{dvcnet_forward.3} parent=1 // pred_region
      _
    $region21: #{dvcnet_forward.3} parent=1 // pred_fallthru
      _
    %v21 = vld [vmem:[%s0] sm:$0x3]
    %v22 = vld [vmem:[%s1] sm:$0xff]
    %v23 = vld [vmem:[%s1 + $0x8] sm:$0xff]
    %v24 = vld [vmem:[%s2] sm:$0x1]
    %v26 = vperm.slane %v24, 0
    %vm28 = vcmask 130048
    %v30 = vsel %vm28, %v21, 0
    %32 = vmatpush.msra.mxu0 0.0
    %33 = vmatpush.msra.mxu0 0.0
    %34 = vmatpush.msra.mxu0 0.0
    %35 = vmatpush.msra.mxu0 0.0
    %36 = vmatpush.msra.mxu0 0.0
    %37 = vmatpush.msra.mxu0 0.0
    %38 = vmatpush.msra.mxu0 0.0
    %39 = vmatpush.msra.mxu0 0.0
    %40 = vmatpush.msra.mxu0 0.0
    %41 = vmatpush.msra.mxu0 0.0
    %42 = vmatpush.msra.mxu0 0.0
    %43 = vmatpush.msra.mxu0 0.0
    %44 = vmatpush.msra.mxu0 0.0
    %45 = vmatpush.msra.mxu0 0.0
    %46 = vmatpush.msra.mxu0 %v23
    %47 = vmatpush.msra.mxu0 %v22
    %48 = vmatmul.f32.gmra.mxu0 %v30
    %v49 = vpop.f32.mrf.mxu0
    %v50 = vadd.f32 %v26, %v49
    %51 = vdwg.mxu0
    %v52 = vmax.f32 %v50, 0.0
    %v53 = vld [vmem:[%s3] sm:$0xff]
    %v54 = vld [vmem:[%s3 + $0x8] sm:$0xff]
    %v55 = vld [vmem:[%s3 + $0x10] sm:$0xff]
    %v56 = vld [vmem:[%s3 + $0x18] sm:$0xff]
    %v57 = vld [vmem:[%s4] sm:$0x1]
    %v59 = vperm.slane %v57, 0
    %vm61 = vcmask 261120
    %v63 = vsel %vm61, %v52, 0
    %65 = vmatpush.msra.mxu0 0.0
    %66 = vmatpush.msra.mxu0 0.0
    %67 = vmatpush.msra.mxu0 0.0
    %68 = vmatpush.msra.mxu0 0.0
    %69 = vmatpush.msra.mxu0 0.0
    %70 = vmatpush.msra.mxu0 0.0
    %71 = vmatpush.msra.mxu0 0.0
    %72 = vmatpush.msra.mxu0 0.0
    %73 = vmatpush.msra.mxu0 0.0
    %74 = vmatpush.msra.mxu0 0.0
    %75 = vmatpush.msra.mxu0 0.0
    %76 = vmatpush.msra.mxu0 0.0
    %77 = vmatpush.msra.mxu0 %v56
    %78 = vmatpush.msra.mxu0 %v55
    %79 = vmatpush.msra.mxu0 %v54
    %80 = vmatpush.msra.mxu0 %v53
    %81 = vmatmul.f32.gmra.mxu0 %v63
    %v82 = vpop.f32.mrf.mxu0
    %v83 = vadd.f32 %v59, %v82
    %84 = vdwg.mxu0
    %vm85 = vcmask 58368
    %86 = vst.msk [vmem:[#allocation2] sm:$0x3] %vm85, %v83
    // Predicated region
    $region22: #{dvcnet_forward.3} parent=1 // pred_check
      _
    $region23: #{dvcnet_forward.3} parent=1 // pred_check_branch
      %88 = sbr.rel (0) target = $region25
    $region24: #{dvcnet_forward.3} parent=1 // pred_region
      %90 = vsyncadd [#allocation3], 0
      %s92 = sshll.u32 [#allocation2], 4
      %s93 = int_to_ptr.vmem [resolvable:$true] %s92
      %s94 = sshll.u32 %s5, 4
      %s95 = int_to_ptr.hbm [resolvable:$true] %s94
      %97 = dma.vmem_to_hbm [thread:$0]  %s93, 32, %s95, [#allocation3]
    $region25: #{dvcnet_forward.3} parent=1 // pred_fallthru
      _
    // Predicated region
    $region26: #{dvcnet_forward.3} parent=1 // pred_check
      _
    $region27: #{dvcnet_forward.3} parent=1 // pred_check_branch
      %99 = sbr.rel (0) target = $region29
    $region28: #{dvcnet_forward.3} parent=1 // pred_region
      %101 = dma.done [#allocation3], 32
    $region29: #{dvcnet_forward.3} parent=1 // pred_fallthru
      _
    %102 = vsyncpa [#allocation3], 1

// kernel: dvcnet_forward.2
$region0: #{dvcnet_forward.2}
  #allocation0 [shape = 'u32[]', space=smem, size = 0x4, offset = 0x4, fixed_abs, tag = 'smem constant byte address 0x4 - core index']
  #allocation1 [shape = 'u32[72,128]{1,0:T(1,128)}', space=vmem, size = 0x9000, scoped, tag = 'internal scratch']
  #allocation2 [shape = 'f32[1,32]{1,0:T(1,128)}', space=vmem, size = 0x200, scoped, tag = 'scratch operand']
  %s0 = inlined_call_operand.vmem [shape: f32[4,256,4], index: 0, kind: input, shape index: {}]
  %s1 = inlined_call_operand.vmem [shape: f32[4,32], index: 1, kind: input, shape index: {}]
  %s2 = inlined_call_operand.vmem [shape: f32[1,32], index: 2, kind: input, shape index: {}]
  %s3 = inlined_call_operand.vmem [shape: f32[32,8], index: 3, kind: input, shape index: {}]
  %s4 = inlined_call_operand.vmem [shape: f32[1,8], index: 4, kind: input, shape index: {}]
  %s5 = inlined_call_operand.vmem [shape: f32[4,1,8], index: 5, kind: output, shape index: {0}]
  %s6 = inlined_call_operand.vmem [shape: f32[4,1,32], index: 6, kind: output, shape index: {1}]
  %7 = xla_tuple %s5, %s6
  %s8 = sld [smem:[#allocation0]]
  $region69: #{dvcnet_forward.2} parent=0
    _
  %s10 = ssub.s32 1, %s8
  %s11 = scalar_select 0, %s10, %s8
  loop: start=0, step=1, limit=10
  $region2: #{dvcnet_forward.2} parent=0 // loop_pre_header
    _
  $region3: #{dvcnet_forward.2} parent=0 // loop_header
    %s13 = sphi 0, %s17
    %p14 = scmp.ge.s32.totalorder %s13, 10
    %s20 = sphi 0, %s32
    %s21 = sphi 0, %s28
    %s22 = sphi 0, %s20
    %s23 = sphi 0, %s21
    %s24 = sphi 0, %s22
    %s25 = sphi 0, %s23
    %s37 = sphi 0, %s39
    %s40 = sphi 0, %s37
    %s41 = sphi 0, %s40
    %s57 = sphi 0, %s41
    %s61 = sphi 0, %s61
    %s63 = sphi 0, %s61
    %s64 = sphi 0, %s63
    %s78 = sphi 0, %s64
    %s82 = sphi 0, %s82
    %s84 = sphi 0, %s82
    %s85 = sphi 0, %s84
    %s99 = sphi 0, %s85
    %s103 = sphi 0, %s103
    %s105 = sphi 0, %s103
    %s106 = sphi 0, %s105
    %s120 = sphi 0, %s106
    %s124 = sphi 0, %s124
    %s126 = sphi 0, %s124
    %s127 = sphi 0, %s126
    %s141 = sphi 0, %s127
    %s147 = sphi 0, %s149
    %s150 = sphi 0, %s147
    %s151 = sphi 0, %s150
    %s167 = sphi 0, %s151
    %s173 = sphi 0, %s175
    %s176 = sphi 0, %s173
    %s177 = sphi 0, %s176
    %s193 = sphi 0, %s177
  $region4: #{dvcnet_forward.2} parent=0 // loop_header_branch
    %16 = sbr.rel (%p14) target = $region8
  $region5: #{dvcnet_forward.2} parent=0 // loop_body
    %s18 = ssub.s32 %s13, 1
    %s19 = ssub.s32 %s13, 2
    %s26 = sadd.s32 1, %s21
    %p27 = scmp.ge.s32.totalorder %s26, 2
    %s28 = scalar_select %p27, 0, %s26
    %s29 = sadd.s32 1, %s20
    %s30 = scalar_select %p27, %s29, %s20
    %p31 = scmp.ge.s32.totalorder %s30, 4
    %s32 = scalar_select %p31, 0, %s30
    %s33 = ssub.s32 %s20, %s32
    %s34 = ssub.s32 %s21, %s28
    %s35 = sor.u32 %s33, %s34
    %p36 = scmp.eq.s32.totalorder %s35, 0
    %s38 = sadd.s32 %s37, 1
    %s39 = scalar_select %p36, %s37, %s38
    %p42 = pneg %p36
    %p43 = scmp.eq.s32.totalorder %s13, 7
    %p44 = por %p42, %p43
    %p45 = scmp.ne.s32.totalorder %s37, %s40
    %p46 = scmp.eq.s32.totalorder %s13, 0
    %p47 = por %p45, %p46
    %p48 = scmp.ne.s32.totalorder %s37, %s40
    %p49 = scmp.eq.s32.totalorder %s18, 7
    %p50 = por %p48, %p49
    %p51 = scmp.ne.s32.totalorder %s40, %s41
    %p52 = scmp.eq.s32.totalorder %s18, 0
    %p53 = por %p51, %p52
    %p54 = scmp.ne.s32.totalorder %s40, %s41
    %p55 = scmp.eq.s32.totalorder %s19, 7
    %p56 = por %p54, %p55
    %p58 = scmp.ne.s32.totalorder %s41, %s57
    %p59 = scmp.eq.s32.totalorder %s19, 0
    %p60 = por %p58, %p59
    %s62 = sadd.s32 %s61, 1
    %p65 = scmp.eq.s32.totalorder %s13, 7
    %p66 = scmp.ne.s32.totalorder %s61, %s63
    %p67 = scmp.eq.s32.totalorder %s13, 0
    %p68 = por %p66, %p67
    %p69 = scmp.ne.s32.totalorder %s61, %s63
    %p70 = scmp.eq.s32.totalorder %s18, 7
    %p71 = por %p69, %p70
    %p72 = scmp.ne.s32.totalorder %s63, %s64
    %p73 = scmp.eq.s32.totalorder %s18, 0
    %p74 = por %p72, %p73
    %p75 = scmp.ne.s32.totalorder %s63, %s64
    %p76 = scmp.eq.s32.totalorder %s19, 7
    %p77 = por %p75, %p76
    %p79 = scmp.ne.s32.totalorder %s64, %s78
    %p80 = scmp.eq.s32.totalorder %s19, 0
    %p81 = por %p79, %p80
    %s83 = sadd.s32 %s82, 1
    %p86 = scmp.eq.s32.totalorder %s13, 7
    %p87 = scmp.ne.s32.totalorder %s82, %s84
    %p88 = scmp.eq.s32.totalorder %s13, 0
    %p89 = por %p87, %p88
    %p90 = scmp.ne.s32.totalorder %s82, %s84
    %p91 = scmp.eq.s32.totalorder %s18, 7
    %p92 = por %p90, %p91
    %p93 = scmp.ne.s32.totalorder %s84, %s85
    %p94 = scmp.eq.s32.totalorder %s18, 0
    %p95 = por %p93, %p94
    %p96 = scmp.ne.s32.totalorder %s84, %s85
    %p97 = scmp.eq.s32.totalorder %s19, 7
    %p98 = por %p96, %p97
    %p100 = scmp.ne.s32.totalorder %s85, %s99
    %p101 = scmp.eq.s32.totalorder %s19, 0
    %p102 = por %p100, %p101
    %s104 = sadd.s32 %s103, 1
    %p107 = scmp.eq.s32.totalorder %s13, 7
    %p108 = scmp.ne.s32.totalorder %s103, %s105
    %p109 = scmp.eq.s32.totalorder %s13, 0
    %p110 = por %p108, %p109
    %p111 = scmp.ne.s32.totalorder %s103, %s105
    %p112 = scmp.eq.s32.totalorder %s18, 7
    %p113 = por %p111, %p112
    %p114 = scmp.ne.s32.totalorder %s105, %s106
    %p115 = scmp.eq.s32.totalorder %s18, 0
    %p116 = por %p114, %p115
    %p117 = scmp.ne.s32.totalorder %s105, %s106
    %p118 = scmp.eq.s32.totalorder %s19, 7
    %p119 = por %p117, %p118
    %p121 = scmp.ne.s32.totalorder %s106, %s120
    %p122 = scmp.eq.s32.totalorder %s19, 0
    %p123 = por %p121, %p122
    %s125 = sadd.s32 %s124, 1
    %p128 = scmp.eq.s32.totalorder %s13, 7
    %p129 = scmp.ne.s32.totalorder %s124, %s126
    %p130 = scmp.eq.s32.totalorder %s13, 0
    %p131 = por %p129, %p130
    %p132 = scmp.ne.s32.totalorder %s124, %s126
    %p133 = scmp.eq.s32.totalorder %s18, 7
    %p134 = por %p132, %p133
    %p135 = scmp.ne.s32.totalorder %s126, %s127
    %p136 = scmp.eq.s32.totalorder %s18, 0
    %p137 = por %p135, %p136
    %p138 = scmp.ne.s32.totalorder %s126, %s127
    %p139 = scmp.eq.s32.totalorder %s19, 7
    %p140 = por %p138, %p139
    %p142 = scmp.ne.s32.totalorder %s127, %s141
    %p143 = scmp.eq.s32.totalorder %s19, 0
    %p144 = por %p142, %p143
    %s145 = ssub.s32 %s20, %s32
    %p146 = scmp.eq.s32.totalorder %s145, 0
    %s148 = sadd.s32 %s147, 1
    %s149 = scalar_select %p146, %s147, %s148
    %p152 = pneg %p146
    %p153 = scmp.eq.s32.totalorder %s13, 7
    %p154 = por %p152, %p153
    %p155 = scmp.ne.s32.totalorder %s147, %s150
    %p156 = scmp.eq.s32.totalorder %s13, 0
    %p157 = por %p155, %p156
    %p158 = scmp.ne.s32.totalorder %s147, %s150
    %p159 = scmp.eq.s32.totalorder %s18, 7
    %p160 = por %p158, %p159
    %p161 = scmp.ne.s32.totalorder %s150, %s151
    %p162 = scmp.eq.s32.totalorder %s18, 0
    %p163 = por %p161, %p162
    %p164 = scmp.ne.s32.totalorder %s150, %s151
    %p165 = scmp.eq.s32.totalorder %s19, 7
    %p166 = por %p164, %p165
    %p168 = scmp.ne.s32.totalorder %s151, %s167
    %p169 = scmp.eq.s32.totalorder %s19, 0
    %p170 = por %p168, %p169
    %s171 = ssub.s32 %s20, %s32
    %p172 = scmp.eq.s32.totalorder %s171, 0
    %s174 = sadd.s32 %s173, 1
    %s175 = scalar_select %p172, %s173, %s174
    %p178 = pneg %p172
    %p179 = scmp.eq.s32.totalorder %s13, 7
    %p180 = por %p178, %p179
    %p181 = scmp.ne.s32.totalorder %s173, %s176
    %p182 = scmp.eq.s32.totalorder %s13, 0
    %p183 = por %p181, %p182
    %p184 = scmp.ne.s32.totalorder %s173, %s176
    %p185 = scmp.eq.s32.totalorder %s18, 7
    %p186 = por %p184, %p185
    %p187 = scmp.ne.s32.totalorder %s176, %s177
    %p188 = scmp.eq.s32.totalorder %s18, 0
    %p189 = por %p187, %p188
    %p190 = scmp.ne.s32.totalorder %s176, %s177
    %p191 = scmp.eq.s32.totalorder %s19, 7
    %p192 = por %p190, %p191
    %p194 = scmp.ne.s32.totalorder %s177, %s193
    %p195 = scmp.eq.s32.totalorder %s19, 0
    %p196 = por %p194, %p195
    %p197 = scmp.le.s32.totalorder 1, %s13
    %p198 = scmp.lt.s32.totalorder %s13, 9
    %p199 = pnand %p197, %p198
    %p200 = pneg %p199
    // Predicated region
    $region9: #{dvcnet_forward.2} parent=5 // pred_check
      _
    $region10: #{dvcnet_forward.2} parent=5 // pred_check_branch
      %202 = sbr.rel (%p199) target = $region12
    $region11: #{dvcnet_forward.2} parent=5 // pred_region
      %s203 = ssub.s32 %s13, 1
      // Predicated region
      $region13: #{dvcnet_forward.2} parent=11 // pred_check
        %p204 = pneg %p74
      $region14: #{dvcnet_forward.2} parent=11 // pred_check_branch
        %206 = sbr.rel (%p204) target = $region16
      $region15: #{dvcnet_forward.2} parent=11 // pred_region
        _
      $region16: #{dvcnet_forward.2} parent=11 // pred_fallthru
        _
      // Predicated region
      $region17: #{dvcnet_forward.2} parent=11 // pred_check
        %p207 = pneg %p95
      $region18: #{dvcnet_forward.2} parent=11 // pred_check_branch
        %209 = sbr.rel (%p207) target = $region20
      $region19: #{dvcnet_forward.2} parent=11 // pred_region
        _
      $region20: #{dvcnet_forward.2} parent=11 // pred_fallthru
        _
      // Predicated region
      $region21: #{dvcnet_forward.2} parent=11 // pred_check
        %p210 = pneg %p116
      $region22: #{dvcnet_forward.2} parent=11 // pred_check_branch
        %212 = sbr.rel (%p210) target = $region24
      $region23: #{dvcnet_forward.2} parent=11 // pred_region
        _
      $region24: #{dvcnet_forward.2} parent=11 // pred_fallthru
        _
      // Predicated region
      $region25: #{dvcnet_forward.2} parent=11 // pred_check
        %p213 = pneg %p137
      $region26: #{dvcnet_forward.2} parent=11 // pred_check_branch
        %215 = sbr.rel (%p213) target = $region28
      $region27: #{dvcnet_forward.2} parent=11 // pred_region
        _
      $region28: #{dvcnet_forward.2} parent=11 // pred_fallthru
        _
    $region12: #{dvcnet_forward.2} parent=5 // pred_fallthru
      _
    %p216 = scmp.lt.s32.totalorder %s13, 8
    // Predicated region
    $region29: #{dvcnet_forward.2} parent=5 // pred_check
      %p217 = pneg %p216
    $region30: #{dvcnet_forward.2} parent=5 // pred_check_branch
      %219 = sbr.rel (%p217) target = $region32
    $region31: #{dvcnet_forward.2} parent=5 // pred_region
      // Predicated region
      $region33: #{dvcnet_forward.2} parent=31 // pred_check
        %p220 = pneg %p47
      $region34: #{dvcnet_forward.2} parent=31 // pred_check_branch
        %222 = sbr.rel (%p220) target = $region36
      $region35: #{dvcnet_forward.2} parent=31 // pred_region
        %s223 = smul.u32 16, %s21
        %p224 = scmp.lt.s32.totalorder %s20, 3
        %s225 = scalar_select %p224, %s20, 3
        %p226 = scmp.lt.s32.totalorder %s223, 31
        %s227 = scalar_select %p226, %s223, 31
        %s228 = smul.addr %s225, 32
        %s229 = sadd.s32 %s227, %s228
        %s230 = smul.addr %s229, 8
        %s231 = scalar_lea.vmem %s0, %s230
        %s232 = smul.u32 16, %s21
      $region36: #{dvcnet_forward.2} parent=31 // pred_fallthru
        _
    $region32: #{dvcnet_forward.2} parent=5 // pred_fallthru
      _
    %p233 = scmp.le.s32.totalorder 1, %s13
    %p234 = scmp.lt.s32.totalorder %s13, 9
    %p235 = pnand %p233, %p234
    %p236 = pneg %p235
    // Predicated region
    $region37: #{dvcnet_forward.2} parent=5 // pred_check
      _
    $region38: #{dvcnet_forward.2} parent=5 // pred_check_branch
      %238 = sbr.rel (%p235) target = $region40
    $region39: #{dvcnet_forward.2} parent=5 // pred_region
      %s239 = ssub.s32 %s13, 1
      %s240 = smul.u32 16, %s23
      %p241 = scmp.lt.s32.totalorder %s22, 3
      %s242 = scalar_select %p241, %s22, 3
      %p243 = scmp.lt.s32.totalorder %s240, 31
      %s244 = scalar_select %p243, %s240, 31
      %s245 = smul.addr %s242, 32
      %s246 = sadd.s32 %s244, %s245
      %s247 = smul.addr %s246, 8
      %s248 = scalar_lea.vmem %s0, %s247
      %p249 = pneg %p53
      %p250 = pneg %p50
      %p251 = pneg %p74
      %p252 = pneg %p71
      %p253 = pneg %p95
      %p254 = pneg %p92
      %p255 = pneg %p116
      %p256 = pneg %p113
      %p257 = pneg %p137
      %p258 = pneg %p134
      %p259 = pneg %p163
      %p260 = pneg %p160
      %p261 = scmp.lt.s32.totalorder %s22, 3
      %s262 = scalar_select %p261, %s22, 3
      %s263 = scalar_lea.vmem %s5, %s262
      %p264 = pneg %p189
      %p265 = pneg %p186
      %p266 = scmp.lt.s32.totalorder %s22, 3
      %s267 = scalar_select %p266, %s22, 3
      %s268 = scalar_lea.vmem %s6, %s267
      %s269 = smul.u32 16, %s23
      %p270 = scmp.lt.s32.totalorder %s22, 3
      %s271 = scalar_select %p270, %s22, 3
      %p272 = scmp.lt.s32.totalorder %s269, 31
      %s273 = scalar_select %p272, %s269, 31
      %s274 = smul.addr %s271, 32
      %s275 = sadd.s32 %s273, %s274
      %s276 = smul.addr %s275, 8
      %s277 = scalar_lea.vmem %s0, %s276
      %s278 = smul.u32 16, %s23
      %p279 = scmp.lt.s32.totalorder %s22, 3
      %s280 = scalar_select %p279, %s22, 3
      %s281 = scalar_lea.vmem %s5, %s280
      %p282 = scmp.lt.s32.totalorder %s22, 3
      %s283 = scalar_select %p282, %s22, 3
      %s284 = scalar_lea.vmem %s6, %s283
      %p285 = scmp.eq.s32.totalorder %s23, 0
      // Predicated region
      $region41: #{dvcnet_forward.2} parent=39 // pred_check
        %p286 = pneg %p285
      $region42: #{dvcnet_forward.2} parent=39 // pred_check_branch
        %288 = sbr.rel (%p286) target = $region44
      $region43: #{dvcnet_forward.2} parent=39 // pred_region
        %vm289 = vcmask 253952
        %290 = vst.msk [vmem:[#allocation2] sm:$0x1] %vm289, 0.0
      $region44: #{dvcnet_forward.2} parent=39 // pred_fallthru
        _
      %v291 = vld [vmem:[%s277] sm:$0xff]
      %v292 = vld [vmem:[%s277 + $0x8] sm:$0xff]
      %v293 = vld [vmem:[%s277 + $0x10] sm:$0xff]
      %v294 = vld [vmem:[%s277 + $0x18] sm:$0xff]
      %v295 = vld [vmem:[%s277 + $0x20] sm:$0xff]
      %v296 = vld [vmem:[%s277 + $0x28] sm:$0xff]
      %v297 = vld [vmem:[%s277 + $0x30] sm:$0xff]
      %v298 = vld [vmem:[%s277 + $0x38] sm:$0xff]
      %v299 = vld [vmem:[%s277 + $0x40] sm:$0xff]
      %v300 = vld [vmem:[%s277 + $0x48] sm:$0xff]
      %v301 = vld [vmem:[%s277 + $0x50] sm:$0xff]
      %v302 = vld [vmem:[%s277 + $0x58] sm:$0xff]
      %v303 = vld [vmem:[%s277 + $0x60] sm:$0xff]
      %v304 = vld [vmem:[%s277 + $0x68] sm:$0xff]
      %v305 = vld [vmem:[%s277 + $0x70] sm:$0xff]
      %v306 = vld [vmem:[%s277 + $0x78] sm:$0xff]
      %v307 = vld [vmem:[%s1] sm:$0xf]
      %v308 = vld [vmem:[%s2] sm:$0x1]
      %v310 = vperm.slane %v308, 0
      %vm312 = vcmask 31744
      %v314 = vsel %vm312, %v291, 0
      %v317 = vsel %vm312, %v292, 0
      %v320 = vsel %vm312, %v293, 0
      %v323 = vsel %vm312, %v294, 0
      %v326 = vsel %vm312, %v295, 0
      %v329 = vsel %vm312, %v296, 0
      %v332 = vsel %vm312, %v297, 0
      %v335 = vsel %vm312, %v298, 0
      %v338 = vsel %vm312, %v299, 0
      %v341 = vsel %vm312, %v300, 0
      %v344 = vsel %vm312, %v301, 0
      %v347 = vsel %vm312, %v302, 0
      %v350 = vsel %vm312, %v303, 0
      %v353 = vsel %vm312, %v304, 0
      %v356 = vsel %vm312, %v305, 0
      %v359 = vsel %vm312, %v306, 0
      %vm361 = vcmask 1043456
      %v363 = vsel %vm361, %v307, 0
      %365 = vmatpush.msra.mxu0 0.0
      %366 = vmatpush.msra.mxu0 0.0
      %367 = vmatpush.msra.mxu0 0.0
      %368 = vmatpush.msra.mxu0 0.0
      %369 = vmatpush.msra.mxu0 0.0
      %370 = vmatpush.msra.mxu0 0.0
      %371 = vmatpush.msra.mxu0 0.0
      %372 = vmatpush.msra.mxu0 0.0
      %373 = vmatpush.msra.mxu0 0.0
      %374 = vmatpush.msra.mxu0 0.0
      %375 = vmatpush.msra.mxu0 0.0
      %376 = vmatpush.msra.mxu0 0.0
      %377 = vmatpush.msra.mxu0 0.0
      %378 = vmatpush.msra.mxu0 0.0
      %379 = vmatpush.msra.mxu0 0.0
      %380 = vmatpush.msra.mxu0 %v363
      %381 = vmatmul.f32.gmra.mxu0 %v314
      %v382 = vpop.f32.mrf.mxu0
      %v383 = vadd.f32 %v310, %v382
      %384 = vmatmul.f32.gmra.mxu0 %v317
      %v385 = vpop.f32.mrf.mxu0
      %v386 = vadd.f32 %v310, %v385
      %387 = vmatmul.f32.gmra.mxu0 %v320
      %v388 = vpop.f32.mrf.mxu0
      %v389 = vadd.f32 %v310, %v388
      %390 = vmatmul.f32.gmra.mxu0 %v323
      %v391 = vpop.f32.mrf.mxu0
      %v392 = vadd.f32 %v310, %v391
      %393 = vmatmul.f32.gmra.mxu0 %v326
      %v394 = vpop.f32.mrf.mxu0
      %v395 = vadd.f32 %v310, %v394
      %396 = vmatmul.f32.gmra.mxu0 %v329
      %v397 = vpop.f32.mrf.mxu0
      %v398 = vadd.f32 %v310, %v397
      %399 = vmatmul.f32.gmra.mxu0 %v332
      %v400 = vpop.f32.mrf.mxu0
      %v401 = vadd.f32 %v310, %v400
      %402 = vmatmul.f32.gmra.mxu0 %v335
      %v403 = vpop.f32.mrf.mxu0
      %v404 = vadd.f32 %v310, %v403
      %405 = vmatmul.f32.gmra.mxu0 %v338
      %v406 = vpop.f32.mrf.mxu0
      %v407 = vadd.f32 %v310, %v406
      %408 = vmatmul.f32.gmra.mxu0 %v341
      %v409 = vpop.f32.mrf.mxu0
      %v410 = vadd.f32 %v310, %v409
      %411 = vmatmul.f32.gmra.mxu0 %v344
      %v412 = vpop.f32.mrf.mxu0
      %v413 = vadd.f32 %v310, %v412
      %414 = vmatmul.f32.gmra.mxu0 %v347
      %v415 = vpop.f32.mrf.mxu0
      %v416 = vadd.f32 %v310, %v415
      %417 = vmatmul.f32.gmra.mxu0 %v350
      %v418 = vpop.f32.mrf.mxu0
      %v419 = vadd.f32 %v310, %v418
      %420 = vmatmul.f32.gmra.mxu0 %v353
      %v421 = vpop.f32.mrf.mxu0
      %v422 = vadd.f32 %v310, %v421
      %423 = vmatmul.f32.gmra.mxu0 %v356
      %v424 = vpop.f32.mrf.mxu0
      %v425 = vadd.f32 %v310, %v424
      %426 = vmatmul.f32.gmra.mxu0 %v359
      %v427 = vpop.f32.mrf.mxu0
      %v428 = vadd.f32 %v310, %v427
      %429 = vdwg.mxu0
      %v430 = vmax.f32 %v383, 0.0
      %v431 = vmax.f32 %v386, 0.0
      %v432 = vmax.f32 %v389, 0.0
      %v433 = vmax.f32 %v392, 0.0
      %v434 = vmax.f32 %v395, 0.0
      %v435 = vmax.f32 %v398, 0.0
      %v436 = vmax.f32 %v401, 0.0
      %v437 = vmax.f32 %v404, 0.0
      %v438 = vmax.f32 %v407, 0.0
      %v439 = vmax.f32 %v410, 0.0
      %v440 = vmax.f32 %v413, 0.0
      %v441 = vmax.f32 %v416, 0.0
      %v442 = vmax.f32 %v419, 0.0
      %v443 = vmax.f32 %v422, 0.0
      %v444 = vmax.f32 %v425, 0.0
      %v445 = vmax.f32 %v428, 0.0
      %v446 = vld [vmem:[#allocation2] sm:$0x1]
      %vm447 = vcmask 261120
      %v448 = vsel %vm447, %v430, 0.0
      %v449 = vsel %vm447, %v431, 0.0
      %v450 = vadd.f32 %v448, %v449
      %v451 = vsel %vm447, %v432, 0.0
      %v452 = vadd.f32 %v450, %v451
      %v453 = vsel %vm447, %v433, 0.0
      %v454 = vadd.f32 %v452, %v453
      %v455 = vsel %vm447, %v434, 0.0
      %v456 = vadd.f32 %v454, %v455
      %v457 = vsel %vm447, %v435, 0.0
      %v458 = vadd.f32 %v456, %v457
      %v459 = vsel %vm447, %v436, 0.0
      %v460 = vadd.f32 %v458, %v459
      %v461 = vsel %vm447, %v437, 0.0
      %v462 = vadd.f32 %v460, %v461
      %v463 = vsel %vm447, %v438, 0.0
      %v464 = vadd.f32 %v462, %v463
      %v465 = vsel %vm447, %v439, 0.0
      %v466 = vadd.f32 %v464, %v465
      %v467 = vsel %vm447, %v440, 0.0
      %v468 = vadd.f32 %v466, %v467
      %v469 = vsel %vm447, %v441, 0.0
      %v470 = vadd.f32 %v468, %v469
      %v471 = vsel %vm447, %v442, 0.0
      %v472 = vadd.f32 %v470, %v471
      %v473 = vsel %vm447, %v443, 0.0
      %v474 = vadd.f32 %v472, %v473
      %v475 = vsel %vm447, %v444, 0.0
      %v476 = vadd.f32 %v474, %v475
      %v477 = vsel %vm447, %v445, 0.0
      %v478 = vadd.f32 %v476, %v477
      %v479 = vrot.slane %v478, 4
      %v480 = vadd.f32 %v478, %v479
      %v481 = vrot.slane %v480, 2
      %v482 = vadd.f32 %v480, %v481
      %v483 = vrot.slane %v482, 1
      %v484 = vadd.f32 %v482, %v483
      %v485 = vadd.f32 %v446, %v484
      %vm486 = vcmask 253952
      %487 = vst.msk [vmem:[#allocation2] sm:$0x1] %vm486, %v485
      %p488 = scmp.eq.s32.totalorder %s23, 1
      // Predicated region
      $region45: #{dvcnet_forward.2} parent=39 // pred_check
        %p489 = pneg %p488
      $region46: #{dvcnet_forward.2} parent=39 // pred_check_branch
        %491 = sbr.rel (%p489) target = $region48
      $region47: #{dvcnet_forward.2} parent=39 // pred_region
        %v492 = vld [vmem:[#allocation2] sm:$0x1]
        %v493 = vmul.f32 %v492, 0.00390625
        %494 = vst.msk [vmem:[%s284] sm:$0x1] %vm486, %v493
        %v495 = vld [vmem:[%s3] sm:$0xff]
        %v496 = vld [vmem:[%s3 + $0x8] sm:$0xff]
        %v497 = vld [vmem:[%s3 + $0x10] sm:$0xff]
        %v498 = vld [vmem:[%s3 + $0x18] sm:$0xff]
        %v499 = vld [vmem:[%s4] sm:$0x1]
        %v501 = vsel %vm447, %v493, 0
        %503 = vmatpush.msra.mxu0 0.0
        %504 = vmatpush.msra.mxu0 0.0
        %505 = vmatpush.msra.mxu0 0.0
        %506 = vmatpush.msra.mxu0 0.0
        %507 = vmatpush.msra.mxu0 0.0
        %508 = vmatpush.msra.mxu0 0.0
        %509 = vmatpush.msra.mxu0 0.0
        %510 = vmatpush.msra.mxu0 0.0
        %511 = vmatpush.msra.mxu0 0.0
        %512 = vmatpush.msra.mxu0 0.0
        %513 = vmatpush.msra.mxu0 0.0
        %514 = vmatpush.msra.mxu0 0.0
        %515 = vmatpush.msra.mxu0 %v498
        %516 = vmatpush.msra.mxu0 %v497
        %517 = vmatpush.msra.mxu0 %v496
        %518 = vmatpush.msra.mxu0 %v495
        %519 = vmatmul.f32.gmra.mxu0 %v501
        %v520 = vpop.f32.mrf.mxu0
        %v521 = vadd.f32 %v499, %v520
        %522 = vdwg.mxu0
        %vm523 = vcmask 57344
        %524 = vst.msk [vmem:[%s281] sm:$0x1] %vm523, %v521
      $region48: #{dvcnet_forward.2} parent=39 // pred_fallthru
        _
      %p525 = scmp.lt.s32.totalorder %s22, 3
      %s526 = scalar_select %p525, %s22, 3
      %s527 = scalar_lea.vmem %s5, %s526
      %p528 = scmp.lt.s32.totalorder %s22, 3
      %s529 = scalar_select %p528, %s22, 3
      %s530 = scalar_lea.vmem %s6, %s529
      // Predicated region
      $region49: #{dvcnet_forward.2} parent=39 // pred_check
        %p531 = pneg %p160
      $region50: #{dvcnet_forward.2} parent=39 // pred_check_branch
        %533 = sbr.rel (%p531) target = $region52
      $region51: #{dvcnet_forward.2} parent=39 // pred_region
        _
      $region52: #{dvcnet_forward.2} parent=39 // pred_fallthru
        _
      // Predicated region
      $region53: #{dvcnet_forward.2} parent=39 // pred_check
        %p534 = pneg %p186
      $region54: #{dvcnet_forward.2} parent=39 // pred_check_branch
        %536 = sbr.rel (%p534) target = $region56
      $region55: #{dvcnet_forward.2} parent=39 // pred_region
        _
      $region56: #{dvcnet_forward.2} parent=39 // pred_fallthru
        _
    $region40: #{dvcnet_forward.2} parent=5 // pred_fallthru
      _
    %p537 = scmp.le.s32.totalorder 2, %s13
    // Predicated region
    $region57: #{dvcnet_forward.2} parent=5 // pred_check
      %p538 = pneg %p537
    $region58: #{dvcnet_forward.2} parent=5 // pred_check_branch
      %540 = sbr.rel (%p538) target = $region60
    $region59: #{dvcnet_forward.2} parent=5 // pred_region
      %s541 = ssub.s32 %s13, 2
      // Predicated region
      $region61: #{dvcnet_forward.2} parent=59 // pred_check
        %p542 = pneg %p166
      $region62: #{dvcnet_forward.2} parent=59 // pred_check_branch
        %544 = sbr.rel (%p542) target = $region64
      $region63: #{dvcnet_forward.2} parent=59 // pred_region
        %p545 = scmp.lt.s32.totalorder %s24, 3
        %s546 = scalar_select %p545, %s24, 3
        %s547 = scalar_lea.vmem %s5, %s546
      $region64: #{dvcnet_forward.2} parent=59 // pred_fallthru
        _
      // Predicated region
      $region65: #{dvcnet_forward.2} parent=59 // pred_check
        %p548 = pneg %p192
      $region66: #{dvcnet_forward.2} parent=59 // pred_check_branch
        %550 = sbr.rel (%p548) target = $region68
      $region67: #{dvcnet_forward.2} parent=59 // pred_region
        %p551 = scmp.lt.s32.totalorder %s24, 3
        %s552 = scalar_select %p551, %s24, 3
        %s553 = scalar_lea.vmem %s6, %s552
      $region68: #{dvcnet_forward.2} parent=59 // pred_fallthru
        _
    $region60: #{dvcnet_forward.2} parent=5 // pred_fallthru
      _
  $region6: #{dvcnet_forward.2} parent=0 // loop_footer
    %s17 = sadd.s32 1, %s13
  $region7: #{dvcnet_forward.2} parent=0 // loop_footer_branch
    %12 = sbr.rel target = $region3
  $region8: #{dvcnet_forward.2} parent=0 // loop_exit
    _

</llo_original>
